<compile_context>
chip_gen: v5e
topology: v5e:2x2
jax: 0.10.0
libtpu: 0.0.40
codegen_flags: <defaults>
</compile_context>

<pallas_src>
import functools
import math

import jax
import jax.numpy as jnp
from jax.experimental import pallas as pl
from jax.experimental.pallas import tpu as pltpu

# Layer sizes of the PyTorch module: 11 -> 32 -> 64 -> 128 -> 64 -> 1
LAYER_SIZES = (11, 32, 64, 128, 64, 1)


def _round_up(v, m):
    return ((v + m - 1) // m) * m


def _make_mlp_kernel(sub_cols, num_sub):
    """Kernel over one (features, tile_b) activation tile.

    Activations are (features, batch): batch rides the 128-wide lane axis so
    input/output DMA is lane-dense and MXU rows are the feature dims.
    Weights are PyTorch (out, in) orientation, so each layer is W @ h.
    """

    def kernel(x_ref,
               w1_ref, b1_ref,
               w2_ref, b2_ref,
               w3_ref, b3_ref,
               w4_ref, b4_ref,
               w5_ref, b5_ref,
               o_ref):

        def columns(c0):
            h = x_ref[:, pl.ds(c0, sub_cols)]           # bf16 (F, C)

            def dense_relu(w_ref, b_ref, act):
                # bf16 x bf16 -> f32 on the MXU; bias + ReLU in f32 on the VPU;
                # one bf16 cast feeding the next layer (keeps vreg pressure low).
                a = jnp.dot(w_ref[...], act,
                            preferred_element_type=jnp.float32) + b_ref[...]
                return jnp.maximum(a, 0.0).astype(jnp.bfloat16)

            h = dense_relu(w1_ref, b1_ref, h)            # (32,  C)
            h = dense_relu(w2_ref, b2_ref, h)            # (64,  C)
            h = dense_relu(w3_ref, b3_ref, h)            # (128, C)
            h = dense_relu(w4_ref, b4_ref, h)            # (64,  C)
            out = jnp.dot(w5_ref[...], h,
                          preferred_element_type=jnp.float32) + b5_ref[...]
            o_ref[:, pl.ds(c0, sub_cols)] = out.astype(o_ref.dtype)

        if num_sub == 1:
            columns(0)
        else:
            @pl.loop(0, num_sub, unroll=num_sub <= 8)
            def _(j):
                columns(pl.multiple_of(j * sub_cols, 128))

    return kernel


@functools.partial(jax.jit, static_argnames=("tile_b", "sub_cols"))
def mlp_forward(x, params, tile_b=4096, sub_cols=512):
    """x: [B, input_size] float32.
    params: list of (W, b) with W shaped (out, in) and b shaped (out, 1),
    i.e. the native PyTorch nn.Linear orientation.
    tile_b: batch tile (lane dim), multiple of 128. Large tiles amortize the
    per-grid-step overhead; it is clamped to round_up(B, 128) for small B.
    sub_cols: in-kernel column sub-block so all 5 layers run on a vreg-resident
    working set (<= ~512 lanes) before moving to the next columns."""
    B, F = x.shape
    out_size = params[-1][0].shape[0]

    # --- tile selection ------------------------------------------------------
    b_ceil = _round_up(B, 128)
    tile_b = _round_up(max(128, min(tile_b, b_ceil)), 128)
    # v7x megacore: if a single tile would cover the whole (large-enough) batch,
    # split it so both TensorCores get a grid step. (No effect on v5e/v6e.)
    if tile_b == b_ceil and tile_b >= 256 and (tile_b // 2) % 128 == 0:
        tile_b //= 2
    b_pad = _round_up(B, tile_b)

    sub_cols = math.gcd(tile_b, _round_up(max(128, min(sub_cols, tile_b)), 128))
    num_sub = tile_b // sub_cols

    # --- input: one fused cast + transpose + pad (bf16 halves the HBM stream) -
    x_t = jnp.pad(x.T.astype(jnp.bfloat16), ((0, 0), (0, b_pad - B)))

    flat_args = [x_t]
    in_specs = [pl.BlockSpec((F, tile_b), lambda i: (0, i))]
    for w, b in params:
        flat_args.append(w.astype(jnp.bfloat16))   # bf16 MXU operand
        flat_args.append(b.astype(jnp.float32))    # f32 bias column (out, 1)
        # Constant index_map -> fetched once, VMEM-resident across grid steps.
        in_specs.append(pl.BlockSpec(w.shape, lambda i: (0, 0)))
        in_specs.append(pl.BlockSpec(b.shape, lambda i: (0, 0)))

    grid = (b_pad // tile_b,)

    # Advisory cost estimate so XLA schedules well around the custom call.
    flops = 2 * sum(LAYER_SIZES[i] * LAYER_SIZES[i + 1]
                    for i in range(len(LAYER_SIZES) - 1)) * b_pad
    weight_bytes = sum(w.size * 2 + b.size * 4 for w, b in params)
    bytes_accessed = x_t.size * 2 + b_pad * out_size * 4 + weight_bytes

    out_t = pl.pallas_call(
        _make_mlp_kernel(sub_cols, num_sub),
        out_shape=jax.ShapeDtypeStruct((out_size, b_pad), jnp.float32),
        grid=grid,
        in_specs=in_specs,
        out_specs=pl.BlockSpec((out_size, tile_b), lambda i: (0, i)),
        compiler_params=pltpu.CompilerParams(
            dimension_semantics=("parallel",),      # megacore sharding on v7x
            vmem_limit_bytes=48 * 1024 * 1024,      # headroom under v7x's 64 MiB
        ),
        cost_estimate=pl.CostEstimate(flops=flops, transcendentals=0,
                                      bytes_accessed=bytes_accessed),
    )(*flat_args)

    return out_t[:, :B].T  # back to [B, out_size] float32


def init_params(key, input_size=11, output_size=1):
    """Deterministic init mirroring PyTorch nn.Linear default.
    Weights kept in (out, in) orientation; biases as (out, 1) columns."""
    sizes = (input_size, 32, 64, 128, 64, output_size)
    params = []
    for i in range(len(sizes) - 1):
        fan_in, fan_out = sizes[i], sizes[i + 1]
        key, kw, kb = jax.random.split(key, 3)
        bound = 1.0 / (fan_in ** 0.5)
        w = jax.random.uniform(kw, (fan_out, fan_in), jnp.float32, -bound, bound)
        b = jax.random.uniform(kb, (fan_out, 1), jnp.float32, -bound, bound)
        params.append((w, b))
    return params


def mlp_reference_f32(x, params):
    """Original PyTorch module semantics (f32 end-to-end)."""
    h = x
    for i, (w, b) in enumerate(params):
        h = h @ w.T + b.T
        if i < len(params) - 1:
            h = jnp.maximum(h, 0.0)
    return h


def mlp_reference_bf16(x, params):
    """Mirrors the kernel's numerics exactly: bf16 dot operands and bf16
    inter-layer activations, f32 accumulation / bias / ReLU."""
    h = x.astype(jnp.bfloat16)
    for i, (w, b) in enumerate(params):
        a = jnp.dot(h, w.astype(jnp.bfloat16).T,
                    preferred_element_type=jnp.float32) + b.T
        if i < len(params) - 1:
            h = jnp.maximum(a, 0.0).astype(jnp.bfloat16)
        else:
            h = a
    return h


if __name__ == "__main__":
    key = jax.random.PRNGKey(0)
    key, kx = jax.random.split(key)

    B, input_size, output_size = 8, 11, 1
    x = jax.random.normal(kx, (B, input_size), jnp.float32)
    params = init_params(jax.random.PRNGKey(42), input_size, output_size)

    out = jax.block_until_ready(mlp_forward(x, params))
    assert out.shape == (B, output_size), out.shape

    ref_bf16 = mlp_reference_bf16(x, params)   # same bf16/f32 compute pattern
    ref_f32 = mlp_reference_f32(x, params)     # original module semantics
    assert jnp.allclose(out, ref_bf16, atol=5e-3, rtol=5e-3), (out, ref_bf16)
    assert jnp.allclose(out, ref_f32, atol=1e-1, rtol=1e-1), (out, ref_f32)

    # Exercise the multi-grid-step path, the in-kernel column sub-loop, and
    # batch padding (B=300 -> b_pad=512, grid=2, 2 sub-blocks of 128 columns).
    key, kx2 = jax.random.split(key)
    x2 = jax.random.normal(kx2, (300, input_size), jnp.float32)
    out2 = jax.block_until_ready(mlp_forward(x2, params, tile_b=256, sub_cols=128))
    assert out2.shape == (300, output_size), out2.shape
    assert jnp.allclose(out2, mlp_reference_bf16(x2, params), atol=5e-3, rtol=5e-3)

    print("KERNEL_OK")
</pallas_src>

<mosaic_0001>
module attributes {stable_mosaic.version = 11 : i64} {
  func.func @kernel(%arg0: i32, %arg1: memref<11x128xbf16, #tpu.memory_space<vmem>>, %arg2: memref<32x11xbf16, #tpu.memory_space<vmem>>, %arg3: memref<32x1xf32, #tpu.memory_space<vmem>>, %arg4: memref<64x32xbf16, #tpu.memory_space<vmem>>, %arg5: memref<64x1xf32, #tpu.memory_space<vmem>>, %arg6: memref<128x64xbf16, #tpu.memory_space<vmem>>, %arg7: memref<128x1xf32, #tpu.memory_space<vmem>>, %arg8: memref<64x128xbf16, #tpu.memory_space<vmem>>, %arg9: memref<64x1xf32, #tpu.memory_space<vmem>>, %arg10: memref<1x64xbf16, #tpu.memory_space<vmem>>, %arg11: memref<1x1xf32, #tpu.memory_space<vmem>>, %arg12: memref<1x128xf32, #tpu.memory_space<vmem>>) attributes {dimension_semantics = [#tpu.dimension_semantics<parallel>], iteration_bounds = array<i64: 1>, scalar_prefetch = 0 : i64, scratch_operands = 0 : i64, tpu.core_type = #tpu.core_type<tc>, window_params = [{transform_indices = @transform_0, window_bounds = array<i64: 11, 128>}, {pipeline_mode = #tpu.pipeline_mode<synchronous>, transform_indices = @transform_1, window_bounds = array<i64: 32, 11>}, {pipeline_mode = #tpu.pipeline_mode<synchronous>, transform_indices = @transform_2, window_bounds = array<i64: 32, 1>}, {pipeline_mode = #tpu.pipeline_mode<synchronous>, transform_indices = @transform_3, window_bounds = array<i64: 64, 32>}, {pipeline_mode = #tpu.pipeline_mode<synchronous>, transform_indices = @transform_4, window_bounds = array<i64: 64, 1>}, {pipeline_mode = #tpu.pipeline_mode<synchronous>, transform_indices = @transform_5, window_bounds = array<i64: 128, 64>}, {pipeline_mode = #tpu.pipeline_mode<synchronous>, transform_indices = @transform_6, window_bounds = array<i64: 128, 1>}, {pipeline_mode = #tpu.pipeline_mode<synchronous>, transform_indices = @transform_7, window_bounds = array<i64: 64, 128>}, {pipeline_mode = #tpu.pipeline_mode<synchronous>, transform_indices = @transform_8, window_bounds = array<i64: 64, 1>}, {pipeline_mode = #tpu.pipeline_mode<synchronous>, transform_indices = @transform_9, window_bounds = array<i64: 1, 64>}, {pipeline_mode = #tpu.pipeline_mode<synchronous>, transform_indices = @transform_10, window_bounds = array<i64: 1, 1>}, {transform_indices = @transform_11, window_bounds = array<i64: 1, 128>}]} {
    %c0 = arith.constant 0 : index
    %c0_0 = arith.constant 0 : index
    %0 = vector.load %arg1[%c0, %c0_0] : memref<11x128xbf16, #tpu.memory_space<vmem>>, vector<11x128xbf16>
    %c0_1 = arith.constant 0 : index
    %c0_2 = arith.constant 0 : index
    %1 = vector.load %arg2[%c0_1, %c0_2] : memref<32x11xbf16, #tpu.memory_space<vmem>>, vector<32x11xbf16>
    %cst = arith.constant dense<0.000000e+00> : vector<32x128xf32>
    %2 = tpu.matmul %1, %0, %cst {dimension_numbers = #tpu.dot_dimension_numbers<[1], [0], [0], [1], [0, 0, 1, 1], [], []>} : vector<32x11xbf16>, vector<11x128xbf16>, vector<32x128xf32> -> vector<32x128xf32>
    %c0_3 = arith.constant 0 : index
    %c0_4 = arith.constant 0 : index
    %3 = vector.load %arg3[%c0_3, %c0_4] : memref<32x1xf32, #tpu.memory_space<vmem>>, vector<32x1xf32>
    %4 = vector.broadcast %3 : vector<32x1xf32> to vector<32x128xf32>
    %5 = arith.addf %2, %4 : vector<32x128xf32>
    %cst_5 = arith.constant 0.000000e+00 : f32
    %6 = vector.broadcast %cst_5 : f32 to vector<32x128xf32>
    %7 = arith.maximumf %5, %6 : vector<32x128xf32>
    %8 = arith.truncf %7 : vector<32x128xf32> to vector<32x128xbf16>
    %c0_6 = arith.constant 0 : index
    %c0_7 = arith.constant 0 : index
    %9 = vector.load %arg4[%c0_6, %c0_7] : memref<64x32xbf16, #tpu.memory_space<vmem>>, vector<64x32xbf16>
    %cst_8 = arith.constant dense<0.000000e+00> : vector<64x128xf32>
    %10 = tpu.matmul %9, %8, %cst_8 {dimension_numbers = #tpu.dot_dimension_numbers<[1], [0], [0], [1], [0, 0, 1, 1], [], []>} : vector<64x32xbf16>, vector<32x128xbf16>, vector<64x128xf32> -> vector<64x128xf32>
    %c0_9 = arith.constant 0 : index
    %c0_10 = arith.constant 0 : index
    %11 = vector.load %arg5[%c0_9, %c0_10] : memref<64x1xf32, #tpu.memory_space<vmem>>, vector<64x1xf32>
    %12 = vector.broadcast %11 : vector<64x1xf32> to vector<64x128xf32>
    %13 = arith.addf %10, %12 : vector<64x128xf32>
    %cst_11 = arith.constant 0.000000e+00 : f32
    %14 = vector.broadcast %cst_11 : f32 to vector<64x128xf32>
    %15 = arith.maximumf %13, %14 : vector<64x128xf32>
    %16 = arith.truncf %15 : vector<64x128xf32> to vector<64x128xbf16>
    %c0_12 = arith.constant 0 : index
    %c0_13 = arith.constant 0 : index
    %17 = vector.load %arg6[%c0_12, %c0_13] : memref<128x64xbf16, #tpu.memory_space<vmem>>, vector<128x64xbf16>
    %cst_14 = arith.constant dense<0.000000e+00> : vector<128x128xf32>
    %18 = tpu.matmul %17, %16, %cst_14 {dimension_numbers = #tpu.dot_dimension_numbers<[1], [0], [0], [1], [0, 0, 1, 1], [], []>} : vector<128x64xbf16>, vector<64x128xbf16>, vector<128x128xf32> -> vector<128x128xf32>
    %c0_15 = arith.constant 0 : index
    %c0_16 = arith.constant 0 : index
    %19 = vector.load %arg7[%c0_15, %c0_16] : memref<128x1xf32, #tpu.memory_space<vmem>>, vector<128x1xf32>
    %20 = vector.broadcast %19 : vector<128x1xf32> to vector<128x128xf32>
    %21 = arith.addf %18, %20 : vector<128x128xf32>
    %cst_17 = arith.constant 0.000000e+00 : f32
    %22 = vector.broadcast %cst_17 : f32 to vector<128x128xf32>
    %23 = arith.maximumf %21, %22 : vector<128x128xf32>
    %24 = arith.truncf %23 : vector<128x128xf32> to vector<128x128xbf16>
    %c0_18 = arith.constant 0 : index
    %c0_19 = arith.constant 0 : index
    %25 = vector.load %arg8[%c0_18, %c0_19] : memref<64x128xbf16, #tpu.memory_space<vmem>>, vector<64x128xbf16>
    %cst_20 = arith.constant dense<0.000000e+00> : vector<64x128xf32>
    %26 = tpu.matmul %25, %24, %cst_20 {dimension_numbers = #tpu.dot_dimension_numbers<[1], [0], [0], [1], [0, 0, 1, 1], [], []>} : vector<64x128xbf16>, vector<128x128xbf16>, vector<64x128xf32> -> vector<64x128xf32>
    %c0_21 = arith.constant 0 : index
    %c0_22 = arith.constant 0 : index
    %27 = vector.load %arg9[%c0_21, %c0_22] : memref<64x1xf32, #tpu.memory_space<vmem>>, vector<64x1xf32>
    %28 = vector.broadcast %27 : vector<64x1xf32> to vector<64x128xf32>
    %29 = arith.addf %26, %28 : vector<64x128xf32>
    %cst_23 = arith.constant 0.000000e+00 : f32
    %30 = vector.broadcast %cst_23 : f32 to vector<64x128xf32>
    %31 = arith.maximumf %29, %30 : vector<64x128xf32>
    %32 = arith.truncf %31 : vector<64x128xf32> to vector<64x128xbf16>
    %c0_24 = arith.constant 0 : index
    %c0_25 = arith.constant 0 : index
    %33 = vector.load %arg10[%c0_24, %c0_25] : memref<1x64xbf16, #tpu.memory_space<vmem>>, vector<1x64xbf16>
    %cst_26 = arith.constant dense<0.000000e+00> : vector<1x128xf32>
    %34 = tpu.matmul %33, %32, %cst_26 {dimension_numbers = #tpu.dot_dimension_numbers<[1], [0], [0], [1], [0, 0, 1, 1], [], []>} : vector<1x64xbf16>, vector<64x128xbf16>, vector<1x128xf32> -> vector<1x128xf32>
    %c0_27 = arith.constant 0 : index
    %c0_28 = arith.constant 0 : index
    %35 = vector.load %arg11[%c0_27, %c0_28] : memref<1x1xf32, #tpu.memory_space<vmem>>, vector<1x1xf32>
    %36 = vector.broadcast %35 : vector<1x1xf32> to vector<1x128xf32>
    %37 = arith.addf %34, %36 : vector<1x128xf32>
    %c0_29 = arith.constant 0 : index
    %c0_30 = arith.constant 0 : index
    %38 = vector.load %arg12[%c0_29, %c0_30] : memref<1x128xf32, #tpu.memory_space<vmem>>, vector<1x128xf32>
    tpu.vector_store %arg12[%c0_29, %c0_30], %37 {strides = array<i32>} : memref<1x128xf32, #tpu.memory_space<vmem>>, vector<1x128xf32>,
    return
  }
  func.func @transform_0(%arg0: i32) -> (i32, i32) {
    %c0_i32 = arith.constant 0 : i32
    %c0_i32_0 = arith.constant 0 : i32
    return %c0_i32, %arg0 : i32, i32
  }
  func.func @transform_1(%arg0: i32) -> (i32, i32) {
    %c0_i32 = arith.constant 0 : i32
    %c0_i32_0 = arith.constant 0 : i32
    %c0_i32_1 = arith.constant 0 : i32
    return %c0_i32, %c0_i32_0 : i32, i32
  }
  func.func @transform_2(%arg0: i32) -> (i32, i32) {
    %c0_i32 = arith.constant 0 : i32
    %c0_i32_0 = arith.constant 0 : i32
    %c0_i32_1 = arith.constant 0 : i32
    return %c0_i32, %c0_i32_0 : i32, i32
  }
  func.func @transform_3(%arg0: i32) -> (i32, i32) {
    %c0_i32 = arith.constant 0 : i32
    %c0_i32_0 = arith.constant 0 : i32
    %c0_i32_1 = arith.constant 0 : i32
    return %c0_i32, %c0_i32_0 : i32, i32
  }
  func.func @transform_4(%arg0: i32) -> (i32, i32) {
    %c0_i32 = arith.constant 0 : i32
    %c0_i32_0 = arith.constant 0 : i32
    %c0_i32_1 = arith.constant 0 : i32
    return %c0_i32, %c0_i32_0 : i32, i32
  }
  func.func @transform_5(%arg0: i32) -> (i32, i32) {
    %c0_i32 = arith.constant 0 : i32
    %c0_i32_0 = arith.constant 0 : i32
    %c0_i32_1 = arith.constant 0 : i32
    return %c0_i32, %c0_i32_0 : i32, i32
  }
  func.func @transform_6(%arg0: i32) -> (i32, i32) {
    %c0_i32 = arith.constant 0 : i32
    %c0_i32_0 = arith.constant 0 : i32
    %c0_i32_1 = arith.constant 0 : i32
    return %c0_i32, %c0_i32_0 : i32, i32
  }
  func.func @transform_7(%arg0: i32) -> (i32, i32) {
    %c0_i32 = arith.constant 0 : i32
    %c0_i32_0 = arith.constant 0 : i32
    %c0_i32_1 = arith.constant 0 : i32
    return %c0_i32, %c0_i32_0 : i32, i32
  }
  func.func @transform_8(%arg0: i32) -> (i32, i32) {
    %c0_i32 = arith.constant 0 : i32
    %c0_i32_0 = arith.constant 0 : i32
    %c0_i32_1 = arith.constant 0 : i32
    return %c0_i32, %c0_i32_0 : i32, i32
  }
  func.func @transform_9(%arg0: i32) -> (i32, i32) {
    %c0_i32 = arith.constant 0 : i32
    %c0_i32_0 = arith.constant 0 : i32
    %c0_i32_1 = arith.constant 0 : i32
    return %c0_i32, %c0_i32_0 : i32, i32
  }
  func.func @transform_10(%arg0: i32) -> (i32, i32) {
    %c0_i32 = arith.constant 0 : i32
    %c0_i32_0 = arith.constant 0 : i32
    %c0_i32_1 = arith.constant 0 : i32
    return %c0_i32, %c0_i32_0 : i32, i32
  }
  func.func @transform_11(%arg0: i32) -> (i32, i32) {
    %c0_i32 = arith.constant 0 : i32
    %c0_i32_0 = arith.constant 0 : i32
    return %c0_i32, %arg0 : i32, i32
  }
}

</mosaic_0001>

<llo_original>
// kernel: mlp_forward.1
$region0: #{mlp_forward.1}
  #allocation0 [shape = 'u32[]', space=smem, size = 0x4, offset = 0x4, fixed_abs, tag = 'smem constant byte address 0x4 - core index']
  #allocation1 [shape = 'u32[72,128]{1,0:T(1,128)}', space=vmem, size = 0x9000, scoped, tag = 'internal scratch']
  #allocation2 [shape = 'f32[1,1]{1,0:T(1,128)S(1)}', space=vmem, size = 0x200, scoped, tag = 'scoped memory for mlp_forward.1']
  %s0 = inlined_call_operand.vmem [shape: bf16[11,128], index: 0, kind: input, shape index: {}]
  %s1 = inlined_call_operand.vmem [shape: bf16[32,11], index: 1, kind: input, shape index: {}]
  %s2 = inlined_call_operand.vmem [shape: f32[32,1], index: 2, kind: input, shape index: {}]
  %s3 = inlined_call_operand.vmem [shape: bf16[64,32], index: 3, kind: input, shape index: {}]
  %s4 = inlined_call_operand.vmem [shape: f32[64,1], index: 4, kind: input, shape index: {}]
  %s5 = inlined_call_operand.vmem [shape: bf16[128,64], index: 5, kind: input, shape index: {}]
  %s6 = inlined_call_operand.vmem [shape: f32[128,1], index: 6, kind: input, shape index: {}]
  %s7 = inlined_call_operand.vmem [shape: bf16[64,128], index: 7, kind: input, shape index: {}]
  %s8 = inlined_call_operand.vmem [shape: f32[64,1], index: 8, kind: input, shape index: {}]
  %s9 = inlined_call_operand.vmem [shape: bf16[1,64], index: 9, kind: input, shape index: {}]
  %s10 = inlined_call_operand.<no memory space> [shape: f32[1,1], index: 10, kind: input, shape index: {}]
  %s11 = inlined_call_operand.vmem [shape: f32[1,128], index: 11, kind: output, shape index: {}]
  %s12 = sld [smem:[#allocation0]]
  $region54: #{mlp_forward.1} parent=0
    _
  %s14 = ssub.s32 1, %s12
  %s15 = scalar_select 0, %s14, %s12
  %v16 = vstv %s10
  %17 = vst [vmem:[#allocation2] sm:$0x1] %v16
  // Predicated region
  $region2: #{mlp_forward.1} parent=0 // pred_check
    _
  $region3: #{mlp_forward.1} parent=0 // pred_check_branch
    %19 = sbr.rel (0) target = $region5
  $region4: #{mlp_forward.1} parent=0 // pred_region
    _
  $region5: #{mlp_forward.1} parent=0 // pred_fallthru
    _
  // Predicated region
  $region6: #{mlp_forward.1} parent=0 // pred_check
    _
  $region7: #{mlp_forward.1} parent=0 // pred_check_branch
    %21 = sbr.rel (0) target = $region9
  $region8: #{mlp_forward.1} parent=0 // pred_region
    _
  $region9: #{mlp_forward.1} parent=0 // pred_fallthru
    _
  // Predicated region
  $region10: #{mlp_forward.1} parent=0 // pred_check
    _
  $region11: #{mlp_forward.1} parent=0 // pred_check_branch
    %23 = sbr.rel (0) target = $region13
  $region12: #{mlp_forward.1} parent=0 // pred_region
    _
  $region13: #{mlp_forward.1} parent=0 // pred_fallthru
    _
  // Predicated region
  $region14: #{mlp_forward.1} parent=0 // pred_check
    _
  $region15: #{mlp_forward.1} parent=0 // pred_check_branch
    %25 = sbr.rel (0) target = $region17
  $region16: #{mlp_forward.1} parent=0 // pred_region
    _
  $region17: #{mlp_forward.1} parent=0 // pred_fallthru
    _
  // Predicated region
  $region18: #{mlp_forward.1} parent=0 // pred_check
    _
  $region19: #{mlp_forward.1} parent=0 // pred_check_branch
    %27 = sbr.rel (0) target = $region21
  $region20: #{mlp_forward.1} parent=0 // pred_region
    _
  $region21: #{mlp_forward.1} parent=0 // pred_fallthru
    _
  // Predicated region
  $region22: #{mlp_forward.1} parent=0 // pred_check
    _
  $region23: #{mlp_forward.1} parent=0 // pred_check_branch
    %29 = sbr.rel (0) target = $region25
  $region24: #{mlp_forward.1} parent=0 // pred_region
    _
  $region25: #{mlp_forward.1} parent=0 // pred_fallthru
    _
  // Predicated region
  $region26: #{mlp_forward.1} parent=0 // pred_check
    _
  $region27: #{mlp_forward.1} parent=0 // pred_check_branch
    %31 = sbr.rel (0) target = $region29
  $region28: #{mlp_forward.1} parent=0 // pred_region
    _
  $region29: #{mlp_forward.1} parent=0 // pred_fallthru
    _
  // Predicated region
  $region30: #{mlp_forward.1} parent=0 // pred_check
    _
  $region31: #{mlp_forward.1} parent=0 // pred_check_branch
    %33 = sbr.rel (0) target = $region33
  $region32: #{mlp_forward.1} parent=0 // pred_region
    _
  $region33: #{mlp_forward.1} parent=0 // pred_fallthru
    _
  // Predicated region
  $region34: #{mlp_forward.1} parent=0 // pred_check
    _
  $region35: #{mlp_forward.1} parent=0 // pred_check_branch
    %35 = sbr.rel (0) target = $region37
  $region36: #{mlp_forward.1} parent=0 // pred_region
    _
  $region37: #{mlp_forward.1} parent=0 // pred_fallthru
    _
  // Predicated region
  $region38: #{mlp_forward.1} parent=0 // pred_check
    _
  $region39: #{mlp_forward.1} parent=0 // pred_check_branch
    %37 = sbr.rel (0) target = $region41
  $region40: #{mlp_forward.1} parent=0 // pred_region
    _
  $region41: #{mlp_forward.1} parent=0 // pred_fallthru
    _
  // Predicated region
  $region42: #{mlp_forward.1} parent=0 // pred_check
    _
  $region43: #{mlp_forward.1} parent=0 // pred_check_branch
    %39 = sbr.rel (0) target = $region45
  $region44: #{mlp_forward.1} parent=0 // pred_region
    _
  $region45: #{mlp_forward.1} parent=0 // pred_fallthru
    _
  %v41 = vld [vmem:[%s0] sm:$0xf]
  %v42 = vld [vmem:[%s0 + $0x4] sm:$0x3]
  %v43 = vld [vmem:[%s1] sm:$0xf]
  %v44 = vld [vmem:[%s1 + $0x4] sm:$0xf]
  %v45 = vld [vmem:[%s1 + $0x8] sm:$0xf]
  %v46 = vld [vmem:[%s1 + $0xc] sm:$0xf]
  %v47 = vld [vmem:[%s2] sm:$0xff]
  %v48 = vld [vmem:[%s2 + $0x8] sm:$0xff]
  %v49 = vld [vmem:[%s2 + $0x10] sm:$0xff]
  %v50 = vld [vmem:[%s2 + $0x18] sm:$0xff]
  %52 = vset.pattern.permute.xlu0 0
  %53 = vperm.xlu0 %52, %v47
  %v54 = vpop.permute.xlu0 %53
  %57 = vset.pattern.permute.xlu0 0
  %58 = vperm.xlu0 %57, %v48
  %v59 = vpop.permute.xlu0 %58
  %62 = vset.pattern.permute.xlu0 0
  %63 = vperm.xlu0 %62, %v49
  %v64 = vpop.permute.xlu0 %63
  %67 = vset.pattern.permute.xlu0 0
  %68 = vperm.xlu0 %67, %v50
  %v69 = vpop.permute.xlu0 %68
  %v75 = vunpack.c.l.b16 %v43
  %v76 = vunpack.c.l.b16 %v44
  %v77 = vunpack.c.l.b16 %v45
  %v78 = vunpack.c.l.b16 %v46
  %v79 = vpack.c.b16 %v76, %v75
  %v80 = vpack.c.b16 %v78, %v77
  %v83 = vunpack.c.l.b16 %v41
  %v84 = vunpack.c.l.b16 %v42
  %v85 = vpack.c.b16 %v84, %v83
  %vm86 = vcmask 89088
  %v88 = vsel %vm86, %v79, 0
  %v91 = vsel %vm86, %v80, 0
  %vm93 = vcmask 1044480
  %vm94 = vcmask 1045504
  %v95 = vsel %vm93, 4294967295, 65535
  %v96 = vsel %vm94, %v95, 0
  %v98 = vand.u32 %v85, %v96
  %100 = vmatpush.bf16.msra.mxu0 0
  %101 = vmatpush.bf16.msra.mxu0 0
  %102 = vmatpush.bf16.msra.mxu0 0
  %103 = vmatpush.bf16.msra.mxu0 0
  %104 = vmatpush.bf16.msra.mxu0 0
  %105 = vmatpush.bf16.msra.mxu0 0
  %106 = vmatpush.bf16.msra.mxu0 0
  %107 = vmatpush.bf16.msra.mxu0 %v98
  %108 = vmatmul.bf16.gmra.mxu0 %v88
  %v109 = vpop.f32.mrf.mxu0
  %v110 = vadd.f32 %v54, %v109
  %v111 = vpop.f32.mrf.mxu0
  %v112 = vadd.f32 %v59, %v111
  %113 = vmatmul.bf16.gmra.mxu0 %v91
  %v114 = vpop.f32.mrf.mxu0
  %v115 = vadd.f32 %v64, %v114
  %v116 = vpop.f32.mrf.mxu0
  %v117 = vadd.f32 %v69, %v116
  %118 = vdwg.mxu0
  %v119 = vmax.f32 %v110, 0.0
  %v120 = vmax.f32 %v112, 0.0
  %v121 = vmax.f32 %v115, 0.0
  %v122 = vmax.f32 %v117, 0.0
  %v123 = vpack.c.bf16 %v120, %v119
  %v124 = vpack.c.bf16 %v122, %v121
  %v125 = vld [vmem:[%s3] sm:$0xf]
  %v126 = vld [vmem:[%s3 + $0x4] sm:$0xf]
  %v127 = vld [vmem:[%s3 + $0x8] sm:$0xf]
  %v128 = vld [vmem:[%s3 + $0xc] sm:$0xf]
  %v129 = vld [vmem:[%s3 + $0x10] sm:$0xf]
  %v130 = vld [vmem:[%s3 + $0x14] sm:$0xf]
  %v131 = vld [vmem:[%s3 + $0x18] sm:$0xf]
  %v132 = vld [vmem:[%s3 + $0x1c] sm:$0xf]
  %v133 = vld [vmem:[%s4] sm:$0xff]
  %v134 = vld [vmem:[%s4 + $0x8] sm:$0xff]
  %v135 = vld [vmem:[%s4 + $0x10] sm:$0xff]
  %v136 = vld [vmem:[%s4 + $0x18] sm:$0xff]
  %v137 = vld [vmem:[%s4 + $0x20] sm:$0xff]
  %v138 = vld [vmem:[%s4 + $0x28] sm:$0xff]
  %v139 = vld [vmem:[%s4 + $0x30] sm:$0xff]
  %v140 = vld [vmem:[%s4 + $0x38] sm:$0xff]
  %142 = vset.pattern.permute.xlu0 0
  %143 = vperm.xlu0 %142, %v133
  %v144 = vpop.permute.xlu0 %143
  %147 = vset.pattern.permute.xlu0 0
  %148 = vperm.xlu0 %147, %v134
  %v149 = vpop.permute.xlu0 %148
  %152 = vset.pattern.permute.xlu0 0
  %153 = vperm.xlu0 %152, %v135
  %v154 = vpop.permute.xlu0 %153
  %157 = vset.pattern.permute.xlu0 0
  %158 = vperm.xlu0 %157, %v136
  %v159 = vpop.permute.xlu0 %158
  %162 = vset.pattern.permute.xlu0 0
  %163 = vperm.xlu0 %162, %v137
  %v164 = vpop.permute.xlu0 %163
  %167 = vset.pattern.permute.xlu0 0
  %168 = vperm.xlu0 %167, %v138
  %v169 = vpop.permute.xlu0 %168
  %172 = vset.pattern.permute.xlu0 0
  %173 = vperm.xlu0 %172, %v139
  %v174 = vpop.permute.xlu0 %173
  %177 = vset.pattern.permute.xlu0 0
  %178 = vperm.xlu0 %177, %v140
  %v179 = vpop.permute.xlu0 %178
  %v189 = vunpack.c.l.b16 %v125
  %v190 = vunpack.c.l.b16 %v126
  %v191 = vunpack.c.l.b16 %v127
  %v192 = vunpack.c.l.b16 %v128
  %v193 = vunpack.c.l.b16 %v129
  %v194 = vunpack.c.l.b16 %v130
  %v195 = vunpack.c.l.b16 %v131
  %v196 = vunpack.c.l.b16 %v132
  %v197 = vpack.c.b16 %v190, %v189
  %v198 = vpack.c.b16 %v192, %v191
  %v199 = vpack.c.b16 %v194, %v193
  %v200 = vpack.c.b16 %v196, %v195
  %vm201 = vcmask 261120
  %v203 = vsel %vm201, %v197, 0
  %v206 = vsel %vm201, %v198, 0
  %v209 = vsel %vm201, %v199, 0
  %v212 = vsel %vm201, %v200, 0
  %214 = vmatpush.bf16.msra.mxu0 0
  %215 = vmatpush.bf16.msra.mxu0 0
  %216 = vmatpush.bf16.msra.mxu0 0
  %217 = vmatpush.bf16.msra.mxu0 0
  %218 = vmatpush.bf16.msra.mxu0 0
  %219 = vmatpush.bf16.msra.mxu0 0
  %220 = vmatpush.bf16.msra.mxu0 %v124
  %221 = vmatpush.bf16.msra.mxu0 %v123
  %222 = vmatmul.bf16.gmra.mxu0 %v203
  %v223 = vpop.f32.mrf.mxu0
  %v224 = vadd.f32 %v144, %v223
  %v225 = vpop.f32.mrf.mxu0
  %v226 = vadd.f32 %v149, %v225
  %227 = vmatmul.bf16.gmra.mxu0 %v206
  %v228 = vpop.f32.mrf.mxu0
  %v229 = vadd.f32 %v154, %v228
  %v230 = vpop.f32.mrf.mxu0
  %v231 = vadd.f32 %v159, %v230
  %232 = vmatmul.bf16.gmra.mxu0 %v209
  %v233 = vpop.f32.mrf.mxu0
  %v234 = vadd.f32 %v164, %v233
  %v235 = vpop.f32.mrf.mxu0
  %v236 = vadd.f32 %v169, %v235
  %237 = vmatmul.bf16.gmra.mxu0 %v212
  %v238 = vpop.f32.mrf.mxu0
  %v239 = vadd.f32 %v174, %v238
  %v240 = vpop.f32.mrf.mxu0
  %v241 = vadd.f32 %v179, %v240
  %242 = vdwg.mxu0
  %v243 = vmax.f32 %v224, 0.0
  %v244 = vmax.f32 %v226, 0.0
  %v245 = vmax.f32 %v229, 0.0
  %v246 = vmax.f32 %v231, 0.0
  %v247 = vmax.f32 %v234, 0.0
  %v248 = vmax.f32 %v236, 0.0
  %v249 = vmax.f32 %v239, 0.0
  %v250 = vmax.f32 %v241, 0.0
  %v251 = vpack.c.bf16 %v244, %v243
  %v252 = vpack.c.bf16 %v246, %v245
  %v253 = vpack.c.bf16 %v248, %v247
  %v254 = vpack.c.bf16 %v250, %v249
  %v255 = vld [vmem:[%s5] sm:$0xf]
  %v256 = vld [vmem:[%s5 + $0x4] sm:$0xf]
  %v257 = vld [vmem:[%s5 + $0x8] sm:$0xf]
  %v258 = vld [vmem:[%s5 + $0xc] sm:$0xf]
  %v259 = vld [vmem:[%s5 + $0x10] sm:$0xf]
  %v260 = vld [vmem:[%s5 + $0x14] sm:$0xf]
  %v261 = vld [vmem:[%s5 + $0x18] sm:$0xf]
  %v262 = vld [vmem:[%s5 + $0x1c] sm:$0xf]
  %v263 = vld [vmem:[%s5 + $0x20] sm:$0xf]
  %v264 = vld [vmem:[%s5 + $0x24] sm:$0xf]
  %v265 = vld [vmem:[%s5 + $0x28] sm:$0xf]
  %v266 = vld [vmem:[%s5 + $0x2c] sm:$0xf]
  %v267 = vld [vmem:[%s5 + $0x30] sm:$0xf]
  %v268 = vld [vmem:[%s5 + $0x34] sm:$0xf]
  %v269 = vld [vmem:[%s5 + $0x38] sm:$0xf]
  %v270 = vld [vmem:[%s5 + $0x3c] sm:$0xf]
  %v271 = vld [vmem:[%s6] sm:$0xff]
  %v272 = vld [vmem:[%s6 + $0x8] sm:$0xff]
  %v273 = vld [vmem:[%s6 + $0x10] sm:$0xff]
  %v274 = vld [vmem:[%s6 + $0x18] sm:$0xff]
  %v275 = vld [vmem:[%s6 + $0x20] sm:$0xff]
  %v276 = vld [vmem:[%s6 + $0x28] sm:$0xff]
  %v277 = vld [vmem:[%s6 + $0x30] sm:$0xff]
  %v278 = vld [vmem:[%s6 + $0x38] sm:$0xff]
  %v279 = vld [vmem:[%s6 + $0x40] sm:$0xff]
  %v280 = vld [vmem:[%s6 + $0x48] sm:$0xff]
  %v281 = vld [vmem:[%s6 + $0x50] sm:$0xff]
  %v282 = vld [vmem:[%s6 + $0x58] sm:$0xff]
  %v283 = vld [vmem:[%s6 + $0x60] sm:$0xff]
  %v284 = vld [vmem:[%s6 + $0x68] sm:$0xff]
  %v285 = vld [vmem:[%s6 + $0x70] sm:$0xff]
  %v286 = vld [vmem:[%s6 + $0x78] sm:$0xff]
  %288 = vset.pattern.permute.xlu0 0
  %289 = vperm.xlu0 %288, %v271
  %v290 = vpop.permute.xlu0 %289
  %293 = vset.pattern.permute.xlu0 0
  %294 = vperm.xlu0 %293, %v272
  %v295 = vpop.permute.xlu0 %294
  %298 = vset.pattern.permute.xlu0 0
  %299 = vperm.xlu0 %298, %v273
  %v300 = vpop.permute.xlu0 %299
  %303 = vset.pattern.permute.xlu0 0
  %304 = vperm.xlu0 %303, %v274
  %v305 = vpop.permute.xlu0 %304
  %308 = vset.pattern.permute.xlu0 0
  %309 = vperm.xlu0 %308, %v275
  %v310 = vpop.permute.xlu0 %309
  %313 = vset.pattern.permute.xlu0 0
  %314 = vperm.xlu0 %313, %v276
  %v315 = vpop.permute.xlu0 %314
  %318 = vset.pattern.permute.xlu0 0
  %319 = vperm.xlu0 %318, %v277
  %v320 = vpop.permute.xlu0 %319
  %323 = vset.pattern.permute.xlu0 0
  %324 = vperm.xlu0 %323, %v278
  %v325 = vpop.permute.xlu0 %324
  %328 = vset.pattern.permute.xlu0 0
  %329 = vperm.xlu0 %328, %v279
  %v330 = vpop.permute.xlu0 %329
  %333 = vset.pattern.permute.xlu0 0
  %334 = vperm.xlu0 %333, %v280
  %v335 = vpop.permute.xlu0 %334
  %338 = vset.pattern.permute.xlu0 0
  %339 = vperm.xlu0 %338, %v281
  %v340 = vpop.permute.xlu0 %339
  %343 = vset.pattern.permute.xlu0 0
  %344 = vperm.xlu0 %343, %v282
  %v345 = vpop.permute.xlu0 %344
  %348 = vset.pattern.permute.xlu0 0
  %349 = vperm.xlu0 %348, %v283
  %v350 = vpop.permute.xlu0 %349
  %353 = vset.pattern.permute.xlu0 0
  %354 = vperm.xlu0 %353, %v284
  %v355 = vpop.permute.xlu0 %354
  %358 = vset.pattern.permute.xlu0 0
  %359 = vperm.xlu0 %358, %v285
  %v360 = vpop.permute.xlu0 %359
  %363 = vset.pattern.permute.xlu0 0
  %364 = vperm.xlu0 %363, %v286
  %v365 = vpop.permute.xlu0 %364
  %v383 = vunpack.c.l.b16 %v255
  %v384 = vunpack.c.l.b16 %v256
  %v385 = vunpack.c.l.b16 %v257
  %v386 = vunpack.c.l.b16 %v258
  %v387 = vunpack.c.l.b16 %v259
  %v388 = vunpack.c.l.b16 %v260
  %v389 = vunpack.c.l.b16 %v261
  %v390 = vunpack.c.l.b16 %v262
  %v391 = vunpack.c.l.b16 %v263
  %v392 = vunpack.c.l.b16 %v264
  %v393 = vunpack.c.l.b16 %v265
  %v394 = vunpack.c.l.b16 %v266
  %v395 = vunpack.c.l.b16 %v267
  %v396 = vunpack.c.l.b16 %v268
  %v397 = vunpack.c.l.b16 %v269
  %v398 = vunpack.c.l.b16 %v270
  %v399 = vpack.c.b16 %v384, %v383
  %v400 = vpack.c.b16 %v386, %v385
  %v401 = vpack.c.b16 %v388, %v387
  %v402 = vpack.c.b16 %v390, %v389
  %v403 = vpack.c.b16 %v392, %v391
  %v404 = vpack.c.b16 %v394, %v393
  %v405 = vpack.c.b16 %v396, %v395
  %v406 = vpack.c.b16 %v398, %v397
  %vm407 = vcmask 523264
  %v409 = vsel %vm407, %v399, 0
  %v412 = vsel %vm407, %v400, 0
  %v415 = vsel %vm407, %v401, 0
  %v418 = vsel %vm407, %v402, 0
  %v421 = vsel %vm407, %v403, 0
  %v424 = vsel %vm407, %v404, 0
  %v427 = vsel %vm407, %v405, 0
  %v430 = vsel %vm407, %v406, 0
  %432 = vmatpush.bf16.msra.mxu0 0
  %433 = vmatpush.bf16.msra.mxu0 0
  %434 = vmatpush.bf16.msra.mxu0 0
  %435 = vmatpush.bf16.msra.mxu0 0
  %436 = vmatpush.bf16.msra.mxu0 %v254
  %437 = vmatpush.bf16.msra.mxu0 %v253
  %438 = vmatpush.bf16.msra.mxu0 %v252
  %439 = vmatpush.bf16.msra.mxu0 %v251
  %440 = vmatmul.bf16.gmra.mxu0 %v409
  %v441 = vpop.f32.mrf.mxu0
  %v442 = vadd.f32 %v290, %v441
  %v443 = vpop.f32.mrf.mxu0
  %v444 = vadd.f32 %v295, %v443
  %445 = vmatmul.bf16.gmra.mxu0 %v412
  %v446 = vpop.f32.mrf.mxu0
  %v447 = vadd.f32 %v300, %v446
  %v448 = vpop.f32.mrf.mxu0
  %v449 = vadd.f32 %v305, %v448
  %450 = vmatmul.bf16.gmra.mxu0 %v415
  %v451 = vpop.f32.mrf.mxu0
  %v452 = vadd.f32 %v310, %v451
  %v453 = vpop.f32.mrf.mxu0
  %v454 = vadd.f32 %v315, %v453
  %455 = vmatmul.bf16.gmra.mxu0 %v418
  %v456 = vpop.f32.mrf.mxu0
  %v457 = vadd.f32 %v320, %v456
  %v458 = vpop.f32.mrf.mxu0
  %v459 = vadd.f32 %v325, %v458
  %460 = vmatmul.bf16.gmra.mxu0 %v421
  %v461 = vpop.f32.mrf.mxu0
  %v462 = vadd.f32 %v330, %v461
  %v463 = vpop.f32.mrf.mxu0
  %v464 = vadd.f32 %v335, %v463
  %465 = vmatmul.bf16.gmra.mxu0 %v424
  %v466 = vpop.f32.mrf.mxu0
  %v467 = vadd.f32 %v340, %v466
  %v468 = vpop.f32.mrf.mxu0
  %v469 = vadd.f32 %v345, %v468
  %470 = vmatmul.bf16.gmra.mxu0 %v427
  %v471 = vpop.f32.mrf.mxu0
  %v472 = vadd.f32 %v350, %v471
  %v473 = vpop.f32.mrf.mxu0
  %v474 = vadd.f32 %v355, %v473
  %475 = vmatmul.bf16.gmra.mxu0 %v430
  %v476 = vpop.f32.mrf.mxu0
  %v477 = vadd.f32 %v360, %v476
  %v478 = vpop.f32.mrf.mxu0
  %v479 = vadd.f32 %v365, %v478
  %480 = vdwg.mxu0
  %v481 = vmax.f32 %v442, 0.0
  %v482 = vmax.f32 %v444, 0.0
  %v483 = vmax.f32 %v447, 0.0
  %v484 = vmax.f32 %v449, 0.0
  %v485 = vmax.f32 %v452, 0.0
  %v486 = vmax.f32 %v454, 0.0
  %v487 = vmax.f32 %v457, 0.0
  %v488 = vmax.f32 %v459, 0.0
  %v489 = vmax.f32 %v462, 0.0
  %v490 = vmax.f32 %v464, 0.0
  %v491 = vmax.f32 %v467, 0.0
  %v492 = vmax.f32 %v469, 0.0
  %v493 = vmax.f32 %v472, 0.0
  %v494 = vmax.f32 %v474, 0.0
  %v495 = vmax.f32 %v477, 0.0
  %v496 = vmax.f32 %v479, 0.0
  %v497 = vpack.c.bf16 %v482, %v481
  %v498 = vpack.c.bf16 %v484, %v483
  %v499 = vpack.c.bf16 %v486, %v485
  %v500 = vpack.c.bf16 %v488, %v487
  %v501 = vpack.c.bf16 %v490, %v489
  %v502 = vpack.c.bf16 %v492, %v491
  %v503 = vpack.c.bf16 %v494, %v493
  %v504 = vpack.c.bf16 %v496, %v495
  %v505 = vld [vmem:[%s7] sm:$0xf]
  %v506 = vld [vmem:[%s7 + $0x4] sm:$0xf]
  %v507 = vld [vmem:[%s7 + $0x8] sm:$0xf]
  %v508 = vld [vmem:[%s7 + $0xc] sm:$0xf]
  %v509 = vld [vmem:[%s7 + $0x10] sm:$0xf]
  %v510 = vld [vmem:[%s7 + $0x14] sm:$0xf]
  %v511 = vld [vmem:[%s7 + $0x18] sm:$0xf]
  %v512 = vld [vmem:[%s7 + $0x1c] sm:$0xf]
  %v513 = vld [vmem:[%s8] sm:$0xff]
  %v514 = vld [vmem:[%s8 + $0x8] sm:$0xff]
  %v515 = vld [vmem:[%s8 + $0x10] sm:$0xff]
  %v516 = vld [vmem:[%s8 + $0x18] sm:$0xff]
  %v517 = vld [vmem:[%s8 + $0x20] sm:$0xff]
  %v518 = vld [vmem:[%s8 + $0x28] sm:$0xff]
  %v519 = vld [vmem:[%s8 + $0x30] sm:$0xff]
  %v520 = vld [vmem:[%s8 + $0x38] sm:$0xff]
  %522 = vset.pattern.permute.xlu0 0
  %523 = vperm.xlu0 %522, %v513
  %v524 = vpop.permute.xlu0 %523
  %527 = vset.pattern.permute.xlu0 0
  %528 = vperm.xlu0 %527, %v514
  %v529 = vpop.permute.xlu0 %528
  %532 = vset.pattern.permute.xlu0 0
  %533 = vperm.xlu0 %532, %v515
  %v534 = vpop.permute.xlu0 %533
  %537 = vset.pattern.permute.xlu0 0
  %538 = vperm.xlu0 %537, %v516
  %v539 = vpop.permute.xlu0 %538
  %542 = vset.pattern.permute.xlu0 0
  %543 = vperm.xlu0 %542, %v517
  %v544 = vpop.permute.xlu0 %543
  %547 = vset.pattern.permute.xlu0 0
  %548 = vperm.xlu0 %547, %v518
  %v549 = vpop.permute.xlu0 %548
  %552 = vset.pattern.permute.xlu0 0
  %553 = vperm.xlu0 %552, %v519
  %v554 = vpop.permute.xlu0 %553
  %557 = vset.pattern.permute.xlu0 0
  %558 = vperm.xlu0 %557, %v520
  %v559 = vpop.permute.xlu0 %558
  %v569 = vunpack.c.l.b16 %v505
  %v570 = vunpack.c.l.b16 %v506
  %v571 = vunpack.c.l.b16 %v507
  %v572 = vunpack.c.l.b16 %v508
  %v573 = vunpack.c.l.b16 %v509
  %v574 = vunpack.c.l.b16 %v510
  %v575 = vunpack.c.l.b16 %v511
  %v576 = vunpack.c.l.b16 %v512
  %v577 = vpack.c.b16 %v570, %v569
  %v578 = vpack.c.b16 %v572, %v571
  %v579 = vpack.c.b16 %v574, %v573
  %v580 = vpack.c.b16 %v576, %v575
  %585 = vmatpush.bf16.msra.mxu0 %v504
  %586 = vmatpush.bf16.msra.mxu0 %v503
  %587 = vmatpush.bf16.msra.mxu0 %v502
  %588 = vmatpush.bf16.msra.mxu0 %v501
  %589 = vmatpush.bf16.msra.mxu0 %v500
  %590 = vmatpush.bf16.msra.mxu0 %v499
  %591 = vmatpush.bf16.msra.mxu0 %v498
  %592 = vmatpush.bf16.msra.mxu0 %v497
  %593 = vmatmul.bf16.gmra.mxu0 %v577
  %v594 = vpop.f32.mrf.mxu0
  %v595 = vadd.f32 %v524, %v594
  %v596 = vpop.f32.mrf.mxu0
  %v597 = vadd.f32 %v529, %v596
  %598 = vmatmul.bf16.gmra.mxu0 %v578
  %v599 = vpop.f32.mrf.mxu0
  %v600 = vadd.f32 %v534, %v599
  %v601 = vpop.f32.mrf.mxu0
  %v602 = vadd.f32 %v539, %v601
  %603 = vmatmul.bf16.gmra.mxu0 %v579
  %v604 = vpop.f32.mrf.mxu0
  %v605 = vadd.f32 %v544, %v604
  %v606 = vpop.f32.mrf.mxu0
  %v607 = vadd.f32 %v549, %v606
  %608 = vmatmul.bf16.gmra.mxu0 %v580
  %v609 = vpop.f32.mrf.mxu0
  %v610 = vadd.f32 %v554, %v609
  %v611 = vpop.f32.mrf.mxu0
  %v612 = vadd.f32 %v559, %v611
  %613 = vdwg.mxu0
  %v614 = vmax.f32 %v595, 0.0
  %v615 = vmax.f32 %v597, 0.0
  %v616 = vmax.f32 %v600, 0.0
  %v617 = vmax.f32 %v602, 0.0
  %v618 = vmax.f32 %v605, 0.0
  %v619 = vmax.f32 %v607, 0.0
  %v620 = vmax.f32 %v610, 0.0
  %v621 = vmax.f32 %v612, 0.0
  %v622 = vpack.c.bf16 %v615, %v614
  %v623 = vpack.c.bf16 %v617, %v616
  %v624 = vpack.c.bf16 %v619, %v618
  %v625 = vpack.c.bf16 %v621, %v620
  %v626 = vld [vmem:[%s9] sm:$0x1]
  %v627 = vld [vmem:[#allocation2] sm:$0x1]
  %629 = vset.pattern.permute.xlu0 0
  %630 = vperm.xlu0 %629, %v627
  %v631 = vpop.permute.xlu0 %630
  %v633 = vperm.slane %v631, 0
  %v635 = vsel %vm407, %v626, 0
  %637 = vmatpush.bf16.msra.mxu0 0
  %638 = vmatpush.bf16.msra.mxu0 0
  %639 = vmatpush.bf16.msra.mxu0 0
  %640 = vmatpush.bf16.msra.mxu0 0
  %641 = vmatpush.bf16.msra.mxu0 %v625
  %642 = vmatpush.bf16.msra.mxu0 %v624
  %643 = vmatpush.bf16.msra.mxu0 %v623
  %644 = vmatpush.bf16.msra.mxu0 %v622
  %645 = vmatmul.bf16.gmra.mxu0 %v635
  %v646 = vpop.f32.mrf.mxu0
  %v647 = vadd.f32 %v633, %v646
  %v648 = vpop.f32.mrf.mxu0
  %649 = vdwg.mxu0
  %650 = vst [vmem:[%s11] sm:$0x1] %v647
  // Predicated region
  $region46: #{mlp_forward.1} parent=0 // pred_check
    _
  $region47: #{mlp_forward.1} parent=0 // pred_check_branch
    %652 = sbr.rel (0) target = $region49
  $region48: #{mlp_forward.1} parent=0 // pred_region
    _
  $region49: #{mlp_forward.1} parent=0 // pred_fallthru
    _
  // Predicated region
  $region50: #{mlp_forward.1} parent=0 // pred_check
    _
  $region51: #{mlp_forward.1} parent=0 // pred_check_branch
    %654 = sbr.rel (0) target = $region53
  $region52: #{mlp_forward.1} parent=0 // pred_region
    _
  $region53: #{mlp_forward.1} parent=0 // pred_fallthru
    _

</llo_original>
